<compile_context>
chip_gen: v6e
topology: v6e:2x2x1
jax: 0.10.0
libtpu: 0.0.40
codegen_flags: <defaults>
</compile_context>

<pallas_src>
import math
import jax
import jax.numpy as jnp
from jax.experimental import pallas as pl
from jax.experimental.pallas import tpu as pltpu

INPUT_DIM = 35
HIDDEN_DIM = 128
OUTPUT_DIM = 256
LN_EPS = 1e-5
_INV_SQRT2 = 1.0 / math.sqrt(2.0)


def _genre_encoder_kernel(
    x_ref,    # (TM, 35)    f32
    w1_ref,   # (35, 128)   bf16
    p1_ref,   # (3, 128)    f32   rows: [b1, gamma1, beta1]
    w2_ref,   # (128, 256)  bf16
    p2_ref,   # (3, 256)    f32   rows: [b2, gamma2, beta2]
    o_ref,    # (TM, 256)   f32 or bf16
):
    b1, g1, be1 = p1_ref[0:1, :], p1_ref[1:2, :], p1_ref[2:3, :]
    b2, g2, be2 = p2_ref[0:1, :], p2_ref[1:2, :], p2_ref[2:3, :]

    # fc1 on the MXU: bf16 operands, f32 accumulation.
    x = x_ref[...].astype(jnp.bfloat16)
    h = jnp.dot(x, w1_ref[...], preferred_element_type=jnp.float32) + b1

    # Exact GELU (erf-based, matches torch.nn.functional.gelu default).
    h = 0.5 * h * (1.0 + jax.lax.erf(h * _INV_SQRT2))

    # LayerNorm(128), single-pass statistics.
    inv_n1 = 1.0 / HIDDEN_DIM
    s1 = jnp.sum(h, axis=-1, keepdims=True)
    q1 = jnp.sum(h * h, axis=-1, keepdims=True)
    mu1 = s1 * inv_n1
    var1 = jnp.maximum(q1 * inv_n1 - mu1 * mu1, 0.0)
    h = (h - mu1) * jax.lax.rsqrt(var1 + LN_EPS)
    h = h * g1 + be1

    # Dropout(p=0.1) in eval mode is identity.

    # fc2 on the MXU: bf16 operands, f32 accumulation.
    y = jnp.dot(h.astype(jnp.bfloat16), w2_ref[...],
                preferred_element_type=jnp.float32) + b2

    # LayerNorm(256), single-pass statistics.
    inv_n2 = 1.0 / OUTPUT_DIM
    s2 = jnp.sum(y, axis=-1, keepdims=True)
    q2 = jnp.sum(y * y, axis=-1, keepdims=True)
    mu2 = s2 * inv_n2
    var2 = jnp.maximum(q2 * inv_n2 - mu2 * mu2, 0.0)
    y = (y - mu2) * jax.lax.rsqrt(var2 + LN_EPS)
    y = y * g2 + be2

    o_ref[...] = y.astype(o_ref.dtype)


def _round_up(n, m):
    return ((n + m - 1) // m) * m


def _num_tensorcores():
    """Best-effort TensorCores-per-chip (v7x: 2, v5e/v6e: 1). Safe fallback: 1."""
    try:
        kind = jax.devices()[0].device_kind.lower()
    except Exception:
        return 1
    return 2 if ("v7" in kind or "7x" in kind) else 1


def _pick_tm(B, tm_max, num_cores):
    """Batch tile: as large as possible (<= tm_max), multiple of 16 (bf16 sublane
    packing), shrunk only for small B. On 2-TC chips (v7x) keep >= 2 grid steps so
    both TensorCores get work; on single-TC chips never split a fitting batch."""
    b16 = _round_up(max(B, 1), 16)
    tm = min(tm_max, b16)
    if num_cores >= 2 and b16 > 16:
        tm = min(tm, max(16, _round_up(pl.cdiv(b16, 2), 16)))
    return tm


def genre_encoder(x, params, *, tm_max=2048, out_dtype=None):
    """x: [B, 35] float32 -> [B, 256] (out_dtype, default x.dtype)."""
    B, D = x.shape
    assert D == INPUT_DIM
    if out_dtype is None:
        out_dtype = x.dtype

    w1, p1, w2, p2 = params

    tm = _pick_tm(B, tm_max, _num_tensorcores())
    grid = (pl.cdiv(B, tm),)   # no host-side padding; last partial block is masked

    full = lambda shape: pl.BlockSpec(shape, lambda i: (0, 0))

    weight_bytes = (w1.size * 2 + w2.size * 2 + p1.size * 4 + p2.size * 4)
    cost = pl.CostEstimate(
        flops=2 * B * (INPUT_DIM * HIDDEN_DIM + HIDDEN_DIM * OUTPUT_DIM),
        transcendentals=B * HIDDEN_DIM,
        bytes_accessed=B * (INPUT_DIM * x.dtype.itemsize
                            + OUTPUT_DIM * jnp.dtype(out_dtype).itemsize)
                       + weight_bytes,
    )

    return pl.pallas_call(
        _genre_encoder_kernel,
        out_shape=jax.ShapeDtypeStruct((B, OUTPUT_DIM), out_dtype),
        grid_spec=pltpu.PrefetchScalarGridSpec(
            num_scalar_prefetch=0,
            grid=grid,
            in_specs=[
                pl.BlockSpec((tm, INPUT_DIM), lambda i: (i, 0)),
                full((INPUT_DIM, HIDDEN_DIM)),
                full((3, HIDDEN_DIM)),
                full((HIDDEN_DIM, OUTPUT_DIM)),
                full((3, OUTPUT_DIM)),
            ],
            out_specs=pl.BlockSpec((tm, OUTPUT_DIM), lambda i: (i, 0)),
        ),
        compiler_params=pltpu.CompilerParams(
            dimension_semantics=("parallel",),
            vmem_limit_bytes=32 * 1024 * 1024,
        ),
        cost_estimate=cost,
    )(x, w1, p1, w2, p2)


def init_params(key):
    """Deterministic init following torch nn.Linear defaults
    (U(-1/sqrt(fan_in), 1/sqrt(fan_in)) for weights and biases),
    ones/zeros for LayerNorm gamma/beta. Weights stored transposed
    (in_dim, out_dim) and cast to bf16 for the MXU. Per-feature params
    packed as (3, N) = [bias, gamma, beta]."""
    k1, k2, k3, k4 = jax.random.split(key, 4)

    bnd1 = 1.0 / math.sqrt(INPUT_DIM)
    w1 = jax.random.uniform(k1, (INPUT_DIM, HIDDEN_DIM), jnp.float32, -bnd1, bnd1)
    b1 = jax.random.uniform(k2, (HIDDEN_DIM,), jnp.float32, -bnd1, bnd1)

    bnd2 = 1.0 / math.sqrt(HIDDEN_DIM)
    w2 = jax.random.uniform(k3, (HIDDEN_DIM, OUTPUT_DIM), jnp.float32, -bnd2, bnd2)
    b2 = jax.random.uniform(k4, (OUTPUT_DIM,), jnp.float32, -bnd2, bnd2)

    p1 = jnp.stack([b1, jnp.ones((HIDDEN_DIM,)), jnp.zeros((HIDDEN_DIM,))]).astype(jnp.float32)
    p2 = jnp.stack([b2, jnp.ones((OUTPUT_DIM,)), jnp.zeros((OUTPUT_DIM,))]).astype(jnp.float32)

    return (w1.astype(jnp.bfloat16), p1, w2.astype(jnp.bfloat16), p2)


def reference(x, params):
    """Pure-JAX reference (same bf16-operand / f32-accumulate matmuls)."""
    w1, p1, w2, p2 = params
    b1, g1, be1 = p1[0:1], p1[1:2], p1[2:3]
    b2, g2, be2 = p2[0:1], p2[1:2], p2[2:3]
    h = jnp.dot(x.astype(jnp.bfloat16), w1, preferred_element_type=jnp.float32) + b1
    h = 0.5 * h * (1.0 + jax.lax.erf(h * _INV_SQRT2))
    mu = h.mean(-1, keepdims=True)
    var = ((h - mu) ** 2).mean(-1, keepdims=True)
    h = (h - mu) * jax.lax.rsqrt(var + LN_EPS) * g1 + be1
    y = jnp.dot(h.astype(jnp.bfloat16), w2, preferred_element_type=jnp.float32) + b2
    mu2 = y.mean(-1, keepdims=True)
    var2 = ((y - mu2) ** 2).mean(-1, keepdims=True)
    return (y - mu2) * jax.lax.rsqrt(var2 + LN_EPS) * g2 + be2


if __name__ == "__main__":
    key = jax.random.PRNGKey(0)
    kp, kx1, kx2 = jax.random.split(key, 3)
    params = init_params(kp)

    # Small batch (single partial block: B=8 < tm=16, masked output write).
    B1 = 8
    x1 = jax.random.normal(kx1, (B1, INPUT_DIM), jnp.float32)
    out1 = jax.block_until_ready(genre_encoder(x1, params))
    ref1 = reference(x1, params)
    assert out1.shape == (B1, OUTPUT_DIM)
    assert jnp.allclose(out1, ref1, atol=2e-2, rtol=2e-2), "mismatch vs reference (B=8)"

    # Non-divisible batch, multi-step grid with a masked final block (tm forced to 16).
    B2 = 37
    x2 = jax.random.normal(kx2, (B2, INPUT_DIM), jnp.float32)
    out2 = jax.block_until_ready(genre_encoder(x2, params, tm_max=16))
    ref2 = reference(x2, params)
    assert out2.shape == (B2, OUTPUT_DIM)
    assert jnp.allclose(out2, ref2, atol=2e-2, rtol=2e-2), "mismatch vs reference (B=37, tm=16)"

    # Same batch with the default (large-tile) configuration.
    out3 = jax.block_until_ready(genre_encoder(x2, params))
    assert out3.shape == (B2, OUTPUT_DIM)
    assert jnp.allclose(out3, ref2, atol=2e-2, rtol=2e-2), "mismatch vs reference (B=37, default tm)"

    print("KERNEL_OK")
</pallas_src>

<mosaic_0001>
module attributes {stable_mosaic.version = 11 : i64} {
  func.func @_genre_encoder_kernel(%arg0: i32, %arg1: memref<16x35xf32, #tpu.memory_space<vmem>>, %arg2: memref<35x128xbf16, #tpu.memory_space<vmem>>, %arg3: memref<3x128xf32, #tpu.memory_space<vmem>>, %arg4: memref<128x256xbf16, #tpu.memory_space<vmem>>, %arg5: memref<3x256xf32, #tpu.memory_space<vmem>>, %arg6: memref<16x256xf32, #tpu.memory_space<vmem>>) attributes {dimension_semantics = [#tpu.dimension_semantics<parallel>], iteration_bounds = array<i64: 1>, scalar_prefetch = 0 : i64, scratch_operands = 0 : i64, tpu.core_type = #tpu.core_type<tc>, window_params = [{transform_indices = @transform_0, window_bounds = array<i64: 16, 35>}, {pipeline_mode = #tpu.pipeline_mode<synchronous>, transform_indices = @transform_1, window_bounds = array<i64: 35, 128>}, {pipeline_mode = #tpu.pipeline_mode<synchronous>, transform_indices = @transform_2, window_bounds = array<i64: 3, 128>}, {pipeline_mode = #tpu.pipeline_mode<synchronous>, transform_indices = @transform_3, window_bounds = array<i64: 128, 256>}, {pipeline_mode = #tpu.pipeline_mode<synchronous>, transform_indices = @transform_4, window_bounds = array<i64: 3, 256>}, {transform_indices = @transform_5, window_bounds = array<i64: 16, 256>}]} {
    %c0 = arith.constant 0 : index
    %c0_0 = arith.constant 0 : index
    %0 = vector.load %arg3[%c0, %c0_0] : memref<3x128xf32, #tpu.memory_space<vmem>>, vector<1x128xf32>
    %c1 = arith.constant 1 : index
    %c0_1 = arith.constant 0 : index
    %1 = vector.load %arg3[%c1, %c0_1] : memref<3x128xf32, #tpu.memory_space<vmem>>, vector<1x128xf32>
    %c2 = arith.constant 2 : index
    %c0_2 = arith.constant 0 : index
    %2 = vector.load %arg3[%c2, %c0_2] : memref<3x128xf32, #tpu.memory_space<vmem>>, vector<1x128xf32>
    %c0_3 = arith.constant 0 : index
    %c0_4 = arith.constant 0 : index
    %3 = vector.load %arg5[%c0_3, %c0_4] : memref<3x256xf32, #tpu.memory_space<vmem>>, vector<1x256xf32>
    %c1_5 = arith.constant 1 : index
    %c0_6 = arith.constant 0 : index
    %4 = vector.load %arg5[%c1_5, %c0_6] : memref<3x256xf32, #tpu.memory_space<vmem>>, vector<1x256xf32>
    %c2_7 = arith.constant 2 : index
    %c0_8 = arith.constant 0 : index
    %5 = vector.load %arg5[%c2_7, %c0_8] : memref<3x256xf32, #tpu.memory_space<vmem>>, vector<1x256xf32>
    %c0_9 = arith.constant 0 : index
    %c0_10 = arith.constant 0 : index
    %6 = vector.load %arg1[%c0_9, %c0_10] : memref<16x35xf32, #tpu.memory_space<vmem>>, vector<16x35xf32>
    %7 = arith.truncf %6 : vector<16x35xf32> to vector<16x35xbf16>
    %c0_11 = arith.constant 0 : index
    %c0_12 = arith.constant 0 : index
    %8 = vector.load %arg2[%c0_11, %c0_12] : memref<35x128xbf16, #tpu.memory_space<vmem>>, vector<35x128xbf16>
    %cst = arith.constant dense<0.000000e+00> : vector<16x128xf32>
    %9 = tpu.matmul %7, %8, %cst {dimension_numbers = #tpu.dot_dimension_numbers<[1], [0], [0], [1], [0, 0, 1, 1], [], []>} : vector<16x35xbf16>, vector<35x128xbf16>, vector<16x128xf32> -> vector<16x128xf32>
    %10 = vector.broadcast %0 : vector<1x128xf32> to vector<16x128xf32>
    %11 = arith.addf %9, %10 : vector<16x128xf32>
    %cst_13 = arith.constant 5.000000e-01 : f32
    %12 = vector.broadcast %cst_13 : f32 to vector<16x128xf32>
    %13 = arith.mulf %12, %11 : vector<16x128xf32>
    %cst_14 = arith.constant 0.707106769 : f32
    %14 = vector.broadcast %cst_14 : f32 to vector<16x128xf32>
    %15 = arith.mulf %11, %14 : vector<16x128xf32>
    %16 = math.erf %15 : vector<16x128xf32>
    %cst_15 = arith.constant 1.000000e+00 : f32
    %17 = vector.broadcast %cst_15 : f32 to vector<16x128xf32>
    %18 = arith.addf %17, %16 : vector<16x128xf32>
    %19 = arith.mulf %13, %18 : vector<16x128xf32>
    %cst_16 = arith.constant dense<0.000000e+00> : vector<16xf32>
    %20 = vector.multi_reduction <add>, %19, %cst_16 [1] : vector<16x128xf32> to vector<16xf32>
    %21 = vector.shape_cast %20 : vector<16xf32> to vector<16x1xf32>
    %22 = arith.mulf %19, %19 : vector<16x128xf32>
    %cst_17 = arith.constant dense<0.000000e+00> : vector<16xf32>
    %23 = vector.multi_reduction <add>, %22, %cst_17 [1] : vector<16x128xf32> to vector<16xf32>
    %24 = vector.shape_cast %23 : vector<16xf32> to vector<16x1xf32>
    %cst_18 = arith.constant 7.812500e-03 : f32
    %25 = vector.broadcast %cst_18 : f32 to vector<16x1xf32>
    %26 = arith.mulf %21, %25 : vector<16x1xf32>
    %cst_19 = arith.constant 7.812500e-03 : f32
    %27 = vector.broadcast %cst_19 : f32 to vector<16x1xf32>
    %28 = arith.mulf %24, %27 : vector<16x1xf32>
    %29 = arith.mulf %26, %26 : vector<16x1xf32>
    %30 = arith.subf %28, %29 : vector<16x1xf32>
    %cst_20 = arith.constant 0.000000e+00 : f32
    %31 = vector.broadcast %cst_20 : f32 to vector<16x1xf32>
    %32 = arith.maximumf %30, %31 : vector<16x1xf32>
    %33 = vector.broadcast %26 : vector<16x1xf32> to vector<16x128xf32>
    %34 = arith.subf %19, %33 : vector<16x128xf32>
    %cst_21 = arith.constant 9.99999974E-6 : f32
    %35 = vector.broadcast %cst_21 : f32 to vector<16x1xf32>
    %36 = arith.addf %32, %35 : vector<16x1xf32>
    %37 = math.rsqrt %36 : vector<16x1xf32>
    %38 = vector.broadcast %37 : vector<16x1xf32> to vector<16x128xf32>
    %39 = arith.mulf %34, %38 : vector<16x128xf32>
    %40 = vector.broadcast %1 : vector<1x128xf32> to vector<16x128xf32>
    %41 = arith.mulf %39, %40 : vector<16x128xf32>
    %42 = vector.broadcast %2 : vector<1x128xf32> to vector<16x128xf32>
    %43 = arith.addf %41, %42 : vector<16x128xf32>
    %44 = arith.truncf %43 : vector<16x128xf32> to vector<16x128xbf16>
    %c0_22 = arith.constant 0 : index
    %c0_23 = arith.constant 0 : index
    %45 = vector.load %arg4[%c0_22, %c0_23] : memref<128x256xbf16, #tpu.memory_space<vmem>>, vector<128x256xbf16>
    %cst_24 = arith.constant dense<0.000000e+00> : vector<16x256xf32>
    %46 = tpu.matmul %44, %45, %cst_24 {dimension_numbers = #tpu.dot_dimension_numbers<[1], [0], [0], [1], [0, 0, 1, 1], [], []>} : vector<16x128xbf16>, vector<128x256xbf16>, vector<16x256xf32> -> vector<16x256xf32>
    %47 = vector.broadcast %3 : vector<1x256xf32> to vector<16x256xf32>
    %48 = arith.addf %46, %47 : vector<16x256xf32>
    %cst_25 = arith.constant dense<0.000000e+00> : vector<16xf32>
    %49 = vector.multi_reduction <add>, %48, %cst_25 [1] : vector<16x256xf32> to vector<16xf32>
    %50 = vector.shape_cast %49 : vector<16xf32> to vector<16x1xf32>
    %51 = arith.mulf %48, %48 : vector<16x256xf32>
    %cst_26 = arith.constant dense<0.000000e+00> : vector<16xf32>
    %52 = vector.multi_reduction <add>, %51, %cst_26 [1] : vector<16x256xf32> to vector<16xf32>
    %53 = vector.shape_cast %52 : vector<16xf32> to vector<16x1xf32>
    %cst_27 = arith.constant 3.906250e-03 : f32
    %54 = vector.broadcast %cst_27 : f32 to vector<16x1xf32>
    %55 = arith.mulf %50, %54 : vector<16x1xf32>
    %cst_28 = arith.constant 3.906250e-03 : f32
    %56 = vector.broadcast %cst_28 : f32 to vector<16x1xf32>
    %57 = arith.mulf %53, %56 : vector<16x1xf32>
    %58 = arith.mulf %55, %55 : vector<16x1xf32>
    %59 = arith.subf %57, %58 : vector<16x1xf32>
    %cst_29 = arith.constant 0.000000e+00 : f32
    %60 = vector.broadcast %cst_29 : f32 to vector<16x1xf32>
    %61 = arith.maximumf %59, %60 : vector<16x1xf32>
    %62 = vector.broadcast %55 : vector<16x1xf32> to vector<16x256xf32>
    %63 = arith.subf %48, %62 : vector<16x256xf32>
    %cst_30 = arith.constant 9.99999974E-6 : f32
    %64 = vector.broadcast %cst_30 : f32 to vector<16x1xf32>
    %65 = arith.addf %61, %64 : vector<16x1xf32>
    %66 = math.rsqrt %65 : vector<16x1xf32>
    %67 = vector.broadcast %66 : vector<16x1xf32> to vector<16x256xf32>
    %68 = arith.mulf %63, %67 : vector<16x256xf32>
    %69 = vector.broadcast %4 : vector<1x256xf32> to vector<16x256xf32>
    %70 = arith.mulf %68, %69 : vector<16x256xf32>
    %71 = vector.broadcast %5 : vector<1x256xf32> to vector<16x256xf32>
    %72 = arith.addf %70, %71 : vector<16x256xf32>
    %c0_31 = arith.constant 0 : index
    %c0_32 = arith.constant 0 : index
    %73 = vector.load %arg6[%c0_31, %c0_32] : memref<16x256xf32, #tpu.memory_space<vmem>>, vector<16x256xf32>
    tpu.vector_store %arg6[%c0_31, %c0_32], %72 {strides = array<i32>} : memref<16x256xf32, #tpu.memory_space<vmem>>, vector<16x256xf32>,
    return
  }
  func.func @transform_0(%arg0: i32) -> (i32, i32) {
    %c0_i32 = arith.constant 0 : i32
    %c0_i32_0 = arith.constant 0 : i32
    return %arg0, %c0_i32 : i32, i32
  }
  func.func @transform_1(%arg0: i32) -> (i32, i32) {
    %c0_i32 = arith.constant 0 : i32
    %c0_i32_0 = arith.constant 0 : i32
    %c0_i32_1 = arith.constant 0 : i32
    return %c0_i32, %c0_i32_0 : i32, i32
  }
  func.func @transform_2(%arg0: i32) -> (i32, i32) {
    %c0_i32 = arith.constant 0 : i32
    %c0_i32_0 = arith.constant 0 : i32
    %c0_i32_1 = arith.constant 0 : i32
    return %c0_i32, %c0_i32_0 : i32, i32
  }
  func.func @transform_3(%arg0: i32) -> (i32, i32) {
    %c0_i32 = arith.constant 0 : i32
    %c0_i32_0 = arith.constant 0 : i32
    %c0_i32_1 = arith.constant 0 : i32
    return %c0_i32, %c0_i32_0 : i32, i32
  }
  func.func @transform_4(%arg0: i32) -> (i32, i32) {
    %c0_i32 = arith.constant 0 : i32
    %c0_i32_0 = arith.constant 0 : i32
    %c0_i32_1 = arith.constant 0 : i32
    return %c0_i32, %c0_i32_0 : i32, i32
  }
  func.func @transform_5(%arg0: i32) -> (i32, i32) {
    %c0_i32 = arith.constant 0 : i32
    %c0_i32_0 = arith.constant 0 : i32
    return %arg0, %c0_i32 : i32, i32
  }
}

</mosaic_0001>

<llo_original>
// kernel: tpu_custom_call.1
$region0: #{tpu_custom_call.1}
  #allocation0 [shape = 'u32[]', space=smem, size = 0x4, offset = 0x4, fixed_abs, tag = 'smem constant byte address 0x4 - core index']
  #allocation1 [shape = 'u32[144,128]{1,0:T(1,128)}', space=vmem, size = 0x12000, scoped, tag = 'internal scratch']
  %s0 = inlined_call_operand.hbm [shape: f32[8,35], index: 0, kind: input, shape index: {}]
  %s1 = inlined_call_operand.hbm [shape: bf16[35,128], index: 1, kind: input, shape index: {}]
  %s2 = inlined_call_operand.hbm [shape: f32[3,128], index: 2, kind: input, shape index: {}]
  %s3 = inlined_call_operand.hbm [shape: bf16[128,256], index: 3, kind: input, shape index: {}]
  %s4 = inlined_call_operand.hbm [shape: f32[3,256], index: 4, kind: input, shape index: {}]
  %s5 = inlined_call_operand.hbm [shape: f32[8,256], index: 5, kind: output, shape index: {}]
  %s6 = sld [smem:[#allocation0]]
  $region50: #{tpu_custom_call.1} parent=0
    _
  %s8 = ssub.s32 1, %s6
  %s9 = scalar_select 0, %s8, %s6
  $region1: #{tpu_custom_call.1} parent=0
    #allocation2 [shape = 'u8[8192]{0}', space=vmem, size = 0x2000, scoped, tag = 'input window, operand 0, single buffered']
    #allocation3 [shape = 's32[1]{0}', space=sflag, size = 0x4, scoped, tag = 'scoped memory for tpu_custom_call.1']
    #allocation4 [shape = 's32[1]{0}', space=sflag, size = 0x4, scoped, tag = 'scoped memory for tpu_custom_call.1']
    #allocation5 [shape = 'u8[10240]{0}', space=vmem, size = 0x2800, scoped, tag = 'input window, operand 1, single buffered']
    #allocation6 [shape = 's32[1]{0}', space=sflag, size = 0x4, scoped, tag = 'scoped memory for tpu_custom_call.1']
    #allocation7 [shape = 'u8[2048]{0}', space=vmem, size = 0x800, scoped, tag = 'input window, operand 2, single buffered']
    #allocation8 [shape = 'u8[65536]{0}', space=vmem, size = 0x10000, scoped, tag = 'input window, operand 3, single buffered']
    #allocation9 [shape = 's32[1]{0}', space=sflag, size = 0x4, scoped, tag = 'scoped memory for tpu_custom_call.1']
    #allocation10 [shape = 'u8[4096]{0}', space=vmem, size = 0x1000, scoped, tag = 'input window, operand 4, single buffered']
    #allocation11 [shape = 'u8[16384]{0}', space=vmem, size = 0x4000, scoped, tag = 'output window, operand 0, single buffered']
    %10 = vsyncpa [#allocation3], 0
    %11 = vsyncpa [#allocation6], 0
    %12 = vsyncpa [#allocation9], 0
    %13 = vsyncpa [#allocation4], 0
    // Predicated region
    $region2: #{tpu_custom_call.1} parent=1 // pred_check
      _
    $region3: #{tpu_custom_call.1} parent=1 // pred_check_branch
      %15 = sbr.rel (0) target = $region5
    $region4: #{tpu_custom_call.1} parent=1 // pred_region
      %s17 = ssub.s32 256, 128
      %18 = vsyncadd [#allocation3], %s17
      %s19 = sshll.u32 [#allocation2], 4
      %s20 = int_to_ptr.vmem [resolvable:$true] %s19
      %25 = dma.hbm_to_vmem [thread:$0]  %s0, 128, %s20, [#allocation3], 128, 128, 8
    $region5: #{tpu_custom_call.1} parent=1 // pred_fallthru
      _
    // Predicated region
    $region6: #{tpu_custom_call.1} parent=1 // pred_check
      _
    $region7: #{tpu_custom_call.1} parent=1 // pred_check_branch
      %27 = sbr.rel (0) target = $region9
    $region8: #{tpu_custom_call.1} parent=1 // pred_region
      %s29 = ssub.s32 320, 320
      %30 = vsyncadd [#allocation6], %s29
      %s31 = sshll.u32 [#allocation5], 4
      %s32 = int_to_ptr.vmem [resolvable:$true] %s31
      %37 = dma.hbm_to_vmem [thread:$0]  %s1, 320, %s32, [#allocation6], 64, 64, 4
    $region9: #{tpu_custom_call.1} parent=1 // pred_fallthru
      _
    // Predicated region
    $region10: #{tpu_custom_call.1} parent=1 // pred_check
      _
    $region11: #{tpu_custom_call.1} parent=1 // pred_check_branch
      %39 = sbr.rel (0) target = $region13
    $region12: #{tpu_custom_call.1} parent=1 // pred_region
      %s41 = ssub.s32 64, 64
      %42 = vsyncadd [#allocation6], %s41
      %s44 = sshll.u32 [#allocation7], 4
      %s45 = int_to_ptr.vmem [resolvable:$true] %s44
      %47 = dma.hbm_to_vmem [thread:$0]  %s2, 64, %s45, [#allocation6]
    $region13: #{tpu_custom_call.1} parent=1 // pred_fallthru
      _
    // Predicated region
    $region14: #{tpu_custom_call.1} parent=1 // pred_check
      _
    $region15: #{tpu_custom_call.1} parent=1 // pred_check_branch
      %49 = sbr.rel (0) target = $region17
    $region16: #{tpu_custom_call.1} parent=1 // pred_region
      %s51 = ssub.s32 2048, 2048
      %52 = vsyncadd [#allocation9], %s51
      %s53 = sshll.u32 [#allocation8], 4
      %s54 = int_to_ptr.vmem [resolvable:$true] %s53
      %59 = dma.hbm_to_vmem [thread:$0]  %s3, 2048, %s54, [#allocation9], 128, 128, 8
    $region17: #{tpu_custom_call.1} parent=1 // pred_fallthru
      _
    // Predicated region
    $region18: #{tpu_custom_call.1} parent=1 // pred_check
      _
    $region19: #{tpu_custom_call.1} parent=1 // pred_check_branch
      %61 = sbr.rel (0) target = $region21
    $region20: #{tpu_custom_call.1} parent=1 // pred_region
      %s63 = ssub.s32 128, 128
      %64 = vsyncadd [#allocation9], %s63
      %s66 = sshll.u32 [#allocation10], 4
      %s67 = int_to_ptr.vmem [resolvable:$true] %s66
      %69 = dma.hbm_to_vmem [thread:$0]  %s4, 128, %s67, [#allocation9]
    $region21: #{tpu_custom_call.1} parent=1 // pred_fallthru
      _
    // Predicated region
    $region22: #{tpu_custom_call.1} parent=1 // pred_check
      _
    $region23: #{tpu_custom_call.1} parent=1 // pred_check_branch
      %71 = sbr.rel (0) target = $region25
    $region24: #{tpu_custom_call.1} parent=1 // pred_region
      %72 = dma.done [#allocation3], 256
    $region25: #{tpu_custom_call.1} parent=1 // pred_fallthru
      _
    // Predicated region
    $region26: #{tpu_custom_call.1} parent=1 // pred_check
      _
    $region27: #{tpu_custom_call.1} parent=1 // pred_check_branch
      %74 = sbr.rel (0) target = $region29
    $region28: #{tpu_custom_call.1} parent=1 // pred_region
      %75 = dma.done [#allocation6], 320
    $region29: #{tpu_custom_call.1} parent=1 // pred_fallthru
      _
    // Predicated region
    $region30: #{tpu_custom_call.1} parent=1 // pred_check
      _
    $region31: #{tpu_custom_call.1} parent=1 // pred_check_branch
      %77 = sbr.rel (0) target = $region33
    $region32: #{tpu_custom_call.1} parent=1 // pred_region
      %78 = dma.done [#allocation6], 64
    $region33: #{tpu_custom_call.1} parent=1 // pred_fallthru
      _
    // Predicated region
    $region34: #{tpu_custom_call.1} parent=1 // pred_check
      _
    $region35: #{tpu_custom_call.1} parent=1 // pred_check_branch
      %80 = sbr.rel (0) target = $region37
    $region36: #{tpu_custom_call.1} parent=1 // pred_region
      %81 = dma.done [#allocation9], 2048
    $region37: #{tpu_custom_call.1} parent=1 // pred_fallthru
      _
    // Predicated region
    $region38: #{tpu_custom_call.1} parent=1 // pred_check
      _
    $region39: #{tpu_custom_call.1} parent=1 // pred_check_branch
      %83 = sbr.rel (0) target = $region41
    $region40: #{tpu_custom_call.1} parent=1 // pred_region
      %84 = dma.done [#allocation9], 128
    $region41: #{tpu_custom_call.1} parent=1 // pred_fallthru
      _
    %v86 = vld [vmem:[#allocation7] sm:$0x1]
    %v87 = vld [vmem:[#allocation7 + $0x1] sm:$0x1]
    %v88 = vld [vmem:[#allocation7 + $0x2] sm:$0x1]
    %v89 = vld [vmem:[#allocation10] ss:$4 sm:$0x3]
    %s90 = scalar_lea.vmem [#allocation10], 1
    %v91 = vld [vmem:[%s90] ss:$4 sm:$0x3]
    %s92 = scalar_lea.vmem [#allocation10], 2
    %v93 = vld [vmem:[%s92] ss:$4 sm:$0x3]
    %v94 = vld [vmem:[#allocation2] sm:$0xff]
    %v95 = vld [vmem:[#allocation2 + $0x8] sm:$0xff]
    %v96 = vpack.c.bf16 %v95, %v94
    %v97 = vld [vmem:[#allocation5] sm:$0xf]
    %v98 = vld [vmem:[#allocation5 + $0x4] sm:$0xf]
    %v99 = vld [vmem:[#allocation5 + $0x8] sm:$0xf]
    %v100 = vld [vmem:[#allocation5 + $0xc] sm:$0xf]
    %v101 = vld [vmem:[#allocation5 + $0x10] sm:$0x3]
    %v102 = vlaneseq
    %v103 = vshrl.u32 %v102, 7
    %v104 = vsub.s32 0, %v103
    %v105 = vrot.slane %v86, %v104
    %v111 = vunpack.c.l.b16 %v97
    %v112 = vunpack.c.l.b16 %v98
    %v113 = vunpack.c.l.b16 %v99
    %v114 = vunpack.c.l.b16 %v100
    %v115 = vunpack.c.l.b16 %v101
    %v116 = vpack.c.b16 %v112, %v111
    %v117 = vpack.c.b16 %v114, %v113
    %v118 = vpack.c.b16 %v115, %v115
    %vm121 = vcmask 285696
    %v123 = vsel %vm121, %v96, 0
    %vm125 = vcmask 1040384
    %vm126 = vcmask 1041408
    %v127 = vsel %vm125, 4294967295, 65535
    %v128 = vsel %vm126, %v127, 0
    %v130 = vand.u32 %v118, %v128
    %132 = vmatprep.subr.bf16.mxu0 0
    %133 = vmatpush1.bf16.msra.mxu0 0
    %134 = vmatprep.subr.bf16.mxu0 0
    %135 = vmatpush1.bf16.msra.mxu0 0
    %136 = vmatprep.subr.bf16.mxu0 0
    %137 = vmatpush1.bf16.msra.mxu0 0
    %138 = vmatprep.subr.bf16.mxu0 0
    %139 = vmatpush1.bf16.msra.mxu0 0
    %140 = vmatprep.subr.bf16.mxu0 0
    %141 = vmatpush1.bf16.msra.mxu0 0
    %142 = vmatprep.subr.bf16.mxu0 0
    %143 = vmatpush1.bf16.msra.mxu0 %v130
    %144 = vmatprep.subr.bf16.mxu0 0
    %145 = vmatpush1.bf16.msra.mxu0 %v117
    %146 = vmatprep.subr.bf16.mxu0 0
    %147 = vmatpush1.bf16.msra.mxu0 %v116
    %148 = vmatprep.subr.bf16.mxu0 0
    %149 = vmatpush2.bf16.msra.mxu0 0
    %150 = vmatprep.subr.bf16.mxu0 0
    %151 = vmatpush2.bf16.msra.mxu0 0
    %152 = vmatprep.subr.bf16.mxu0 0
    %153 = vmatpush2.bf16.msra.mxu0 0
    %154 = vmatprep.subr.bf16.mxu0 0
    %155 = vmatpush2.bf16.msra.mxu0 0
    %156 = vmatprep.subr.bf16.mxu0 0
    %157 = vmatpush2.bf16.msra.mxu0 0
    %158 = vmatprep.subr.bf16.mxu0 0
    %159 = vmatpush2.bf16.msra.mxu0 0
    %160 = vmatprep.subr.bf16.mxu0 0
    %161 = vmatpush2.bf16.msra.mxu0 0
    %162 = vmatprep.subr.bf16.mxu0 0
    %163 = vmatpush2.bf16.msra.mxu0 0
    %164 = vmatprep.mubr.bf16.mxu0 0
    %165 = vmatmul.mubr.bf16.gmra.mxu0 %v123
    %v166 = vpop.f32.mrf.mxu0
    %v167 = vadd.f32 %v105, %v166
    %v168 = vpop.f32.mrf.mxu0
    %v169 = vpop.f32.mrf.mxu0
    %v170 = vadd.f32 %v105, %v169
    %v171 = vpop.f32.mrf.mxu0
    %172 = vdwg.mxu0
    %v173 = vmul.f32 %v167, 0.5
    %v174 = vmul.f32 %v170, 0.5
    %v175 = vmul.f32 %v167, 0.70710677
    %v176 = vmul.f32 %v170, 0.70710677
    %v177 = verf.f32.pop %v175
    %v178 = verf.f32.pop %v176
    %v179 = vadd.f32 %v177, 1.0
    %v180 = vadd.f32 %v178, 1.0
    %v181 = vmul.f32 %v173, %v179
    %v182 = vmul.f32 %v174, %v180
    %183 = vadd.xlane.f32.xlu0 %v181
    %v184 = vpop.xlane.xlu0 %183
    %185 = vadd.xlane.f32.xlu0 %v182
    %v186 = vpop.xlane.xlu0 %185
    %v187 = vmul.f32 %v181, %v181
    %v188 = vmul.f32 %v182, %v182
    %189 = vadd.xlane.f32.xlu0 %v187
    %v190 = vpop.xlane.xlu0 %189
    %191 = vadd.xlane.f32.xlu0 %v188
    %v192 = vpop.xlane.xlu0 %191
    %v193 = vmul.f32 %v184, 0.0078125
    %v194 = vmul.f32 %v186, 0.0078125
    %v195 = vmul.f32 %v190, 0.0078125
    %v196 = vmul.f32 %v192, 0.0078125
    %v197 = vmul.f32 %v193, %v193
    %v198 = vmul.f32 %v194, %v194
    %v199 = vsub.f32 %v195, %v197
    %v200 = vsub.f32 %v196, %v198
    %v201 = vmax.f32 %v199, 0.0
    %v202 = vmax.f32 %v200, 0.0
    %v203 = vsub.f32 %v181, %v193
    %v204 = vsub.f32 %v182, %v194
    %v205 = vadd.f32 %v201, 1e-05
    %v206 = vadd.f32 %v202, 1e-05
    %v207 = vrsqrt.pop %v205
    %v208 = vrsqrt.pop %v206
    %v209 = vmul.f32 %v203, %v207
    %v210 = vmul.f32 %v204, %v208
    %v211 = vlaneseq
    %v212 = vshrl.u32 %v211, 7
    %v213 = vsub.s32 0, %v212
    %v214 = vrot.slane %v87, %v213
    %v215 = vmul.f32 %v209, %v214
    %v216 = vmul.f32 %v210, %v214
    %v217 = vlaneseq
    %v218 = vshrl.u32 %v217, 7
    %v219 = vsub.s32 0, %v218
    %v220 = vrot.slane %v88, %v219
    %v221 = vadd.f32 %v215, %v220
    %v222 = vadd.f32 %v216, %v220
    %v223 = vpack.c.bf16 %v222, %v221
    %v224 = vld [vmem:[#allocation8] sm:$0xff]
    %v225 = vld [vmem:[#allocation8 + $0x8] sm:$0xff]
    %v226 = vld [vmem:[#allocation8 + $0x10] sm:$0xff]
    %v227 = vld [vmem:[#allocation8 + $0x18] sm:$0xff]
    %v228 = vld [vmem:[#allocation8 + $0x20] sm:$0xff]
    %v229 = vld [vmem:[#allocation8 + $0x28] sm:$0xff]
    %v230 = vld [vmem:[#allocation8 + $0x30] sm:$0xff]
    %v231 = vld [vmem:[#allocation8 + $0x38] sm:$0xff]
    %v232 = vld [vmem:[#allocation8 + $0x40] sm:$0xff]
    %v233 = vld [vmem:[#allocation8 + $0x48] sm:$0xff]
    %v234 = vld [vmem:[#allocation8 + $0x50] sm:$0xff]
    %v235 = vld [vmem:[#allocation8 + $0x58] sm:$0xff]
    %v236 = vld [vmem:[#allocation8 + $0x60] sm:$0xff]
    %v237 = vld [vmem:[#allocation8 + $0x68] sm:$0xff]
    %v238 = vld [vmem:[#allocation8 + $0x70] sm:$0xff]
    %v239 = vld [vmem:[#allocation8 + $0x78] sm:$0xff]
    %v241 = vlaneseq
    %v242 = vshrl.u32 %v241, 7
    %v243 = vsub.s32 0, %v242
    %v244 = vrot.slane %v89, %v243
    %v245 = vlaneseq
    %v246 = vshrl.u32 %v245, 7
    %v247 = vsub.s32 1, %v246
    %v248 = vrot.slane %v89, %v247
    %v267 = vunpack.c.l.b16 %v224
    %v268 = vunpack.c.h.b16 %v224
    %v269 = vunpack.c.l.b16 %v225
    %v270 = vunpack.c.h.b16 %v225
    %v271 = vunpack.c.l.b16 %v226
    %v272 = vunpack.c.h.b16 %v226
    %v273 = vunpack.c.l.b16 %v227
    %v274 = vunpack.c.h.b16 %v227
    %v275 = vunpack.c.l.b16 %v228
    %v276 = vunpack.c.h.b16 %v228
    %v277 = vunpack.c.l.b16 %v229
    %v278 = vunpack.c.h.b16 %v229
    %v279 = vunpack.c.l.b16 %v230
    %v280 = vunpack.c.h.b16 %v230
    %v281 = vunpack.c.l.b16 %v231
    %v282 = vunpack.c.h.b16 %v231
    %v283 = vunpack.c.l.b16 %v232
    %v284 = vunpack.c.h.b16 %v232
    %v285 = vunpack.c.l.b16 %v233
    %v286 = vunpack.c.h.b16 %v233
    %v287 = vunpack.c.l.b16 %v234
    %v288 = vunpack.c.h.b16 %v234
    %v289 = vunpack.c.l.b16 %v235
    %v290 = vunpack.c.h.b16 %v235
    %v291 = vunpack.c.l.b16 %v236
    %v292 = vunpack.c.h.b16 %v236
    %v293 = vunpack.c.l.b16 %v237
    %v294 = vunpack.c.h.b16 %v237
    %v295 = vunpack.c.l.b16 %v238
    %v296 = vunpack.c.h.b16 %v238
    %v297 = vunpack.c.l.b16 %v239
    %v298 = vunpack.c.h.b16 %v239
    %v299 = vpack.c.b16 %v269, %v267
    %v300 = vpack.c.b16 %v270, %v268
    %v301 = vpack.c.b16 %v273, %v271
    %v302 = vpack.c.b16 %v274, %v272
    %v303 = vpack.c.b16 %v277, %v275
    %v304 = vpack.c.b16 %v278, %v276
    %v305 = vpack.c.b16 %v281, %v279
    %v306 = vpack.c.b16 %v282, %v280
    %v307 = vpack.c.b16 %v285, %v283
    %v308 = vpack.c.b16 %v286, %v284
    %v309 = vpack.c.b16 %v289, %v287
    %v310 = vpack.c.b16 %v290, %v288
    %v311 = vpack.c.b16 %v293, %v291
    %v312 = vpack.c.b16 %v294, %v292
    %v313 = vpack.c.b16 %v297, %v295
    %v314 = vpack.c.b16 %v298, %v296
    %331 = vmatprep.subr.bf16.mxu0 %v314
    %332 = vmatpush1.bf16.msra.mxu0 %v313
    %333 = vmatprep.subr.bf16.mxu0 %v312
    %334 = vmatpush1.bf16.msra.mxu0 %v311
    %335 = vmatprep.subr.bf16.mxu0 %v310
    %336 = vmatpush1.bf16.msra.mxu0 %v309
    %337 = vmatprep.subr.bf16.mxu0 %v308
    %338 = vmatpush1.bf16.msra.mxu0 %v307
    %339 = vmatprep.subr.bf16.mxu0 %v306
    %340 = vmatpush1.bf16.msra.mxu0 %v305
    %341 = vmatprep.subr.bf16.mxu0 %v304
    %342 = vmatpush1.bf16.msra.mxu0 %v303
    %343 = vmatprep.subr.bf16.mxu0 %v302
    %344 = vmatpush1.bf16.msra.mxu0 %v301
    %345 = vmatprep.subr.bf16.mxu0 %v300
    %346 = vmatpush1.bf16.msra.mxu0 %v299
    %347 = vmatprep.subr.bf16.mxu0 0
    %348 = vmatpush2.bf16.msra.mxu0 0
    %349 = vmatprep.subr.bf16.mxu0 0
    %350 = vmatpush2.bf16.msra.mxu0 0
    %351 = vmatprep.subr.bf16.mxu0 0
    %352 = vmatpush2.bf16.msra.mxu0 0
    %353 = vmatprep.subr.bf16.mxu0 0
    %354 = vmatpush2.bf16.msra.mxu0 0
    %355 = vmatprep.subr.bf16.mxu0 0
    %356 = vmatpush2.bf16.msra.mxu0 0
    %357 = vmatprep.subr.bf16.mxu0 0
    %358 = vmatpush2.bf16.msra.mxu0 0
    %359 = vmatprep.subr.bf16.mxu0 0
    %360 = vmatpush2.bf16.msra.mxu0 0
    %361 = vmatprep.subr.bf16.mxu0 0
    %362 = vmatpush2.bf16.msra.mxu0 0
    %363 = vmatprep.mubr.bf16.mxu0 0
    %364 = vmatmul.mubr.bf16.gmra.mxu0 %v223
    %v365 = vpop.f32.mrf.mxu0
    %v366 = vadd.f32 %v244, %v365
    %v367 = vpop.f32.mrf.mxu0
    %v368 = vadd.f32 %v248, %v367
    %v369 = vpop.f32.mrf.mxu0
    %v370 = vadd.f32 %v244, %v369
    %v371 = vpop.f32.mrf.mxu0
    %v372 = vadd.f32 %v248, %v371
    %373 = vdwg.mxu0
    %v374 = vadd.f32 %v366, %v368
    %375 = vadd.xlane.f32.xlu0 %v374
    %v376 = vpop.xlane.xlu0 %375
    %v377 = vadd.f32 %v370, %v372
    %378 = vadd.xlane.f32.xlu0 %v377
    %v379 = vpop.xlane.xlu0 %378
    %v380 = vmul.f32 %v366, %v366
    %v381 = vmul.f32 %v368, %v368
    %v382 = vmul.f32 %v370, %v370
    %v383 = vmul.f32 %v372, %v372
    %v384 = vadd.f32 %v380, %v381
    %385 = vadd.xlane.f32.xlu0 %v384
    %v386 = vpop.xlane.xlu0 %385
    %v387 = vadd.f32 %v382, %v383
    %388 = vadd.xlane.f32.xlu0 %v387
    %v389 = vpop.xlane.xlu0 %388
    %v390 = vmul.f32 %v376, 0.00390625
    %v391 = vmul.f32 %v379, 0.00390625
    %v392 = vmul.f32 %v386, 0.00390625
    %v393 = vmul.f32 %v389, 0.00390625
    %v394 = vmul.f32 %v390, %v390
    %v395 = vmul.f32 %v391, %v391
    %v396 = vsub.f32 %v392, %v394
    %v397 = vsub.f32 %v393, %v395
    %v398 = vmax.f32 %v396, 0.0
    %v399 = vmax.f32 %v397, 0.0
    %v400 = vsub.f32 %v366, %v390
    %v401 = vsub.f32 %v368, %v390
    %v402 = vsub.f32 %v370, %v391
    %v403 = vsub.f32 %v372, %v391
    %v404 = vadd.f32 %v398, 1e-05
    %v405 = vadd.f32 %v399, 1e-05
    %v406 = vrsqrt.pop %v404
    %v407 = vrsqrt.pop %v405
    %v408 = vmul.f32 %v400, %v406
    %v409 = vmul.f32 %v401, %v406
    %v410 = vmul.f32 %v402, %v407
    %v411 = vmul.f32 %v403, %v407
    %v413 = vlaneseq
    %v414 = vshrl.u32 %v413, 7
    %v415 = vsub.s32 0, %v414
    %v416 = vrot.slane %v91, %v415
    %v417 = vlaneseq
    %v418 = vshrl.u32 %v417, 7
    %v419 = vsub.s32 1, %v418
    %v420 = vrot.slane %v91, %v419
    %v423 = vmul.f32 %v408, %v416
    %v424 = vmul.f32 %v409, %v420
    %v425 = vmul.f32 %v410, %v416
    %v426 = vmul.f32 %v411, %v420
    %v428 = vlaneseq
    %v429 = vshrl.u32 %v428, 7
    %v430 = vsub.s32 0, %v429
    %v431 = vrot.slane %v93, %v430
    %v432 = vlaneseq
    %v433 = vshrl.u32 %v432, 7
    %v434 = vsub.s32 1, %v433
    %v435 = vrot.slane %v93, %v434
    %v438 = vadd.f32 %v423, %v431
    %v439 = vadd.f32 %v424, %v435
    %v440 = vadd.f32 %v425, %v431
    %v441 = vadd.f32 %v426, %v435
    %442 = vst [vmem:[#allocation11] sm:$0xff] %v438
    %443 = vst [vmem:[#allocation11 + $0x8] sm:$0xff] %v439
    %444 = vst [vmem:[#allocation11 + $0x10] sm:$0xff] %v440
    %445 = vst [vmem:[#allocation11 + $0x18] sm:$0xff] %v441
    // Predicated region
    $region42: #{tpu_custom_call.1} parent=1 // pred_check
      _
    $region43: #{tpu_custom_call.1} parent=1 // pred_check_branch
      %447 = sbr.rel (0) target = $region45
    $region44: #{tpu_custom_call.1} parent=1 // pred_region
      %s449 = ssub.s32 512, 256
      %450 = vsyncadd [#allocation4], %s449
      %s451 = sshll.u32 [#allocation11], 4
      %s452 = int_to_ptr.vmem [resolvable:$true] %s451
      %457 = dma.vmem_to_hbm [thread:$0]  %s452, 256, %s5, [#allocation4], 256, 256, 16
    $region45: #{tpu_custom_call.1} parent=1 // pred_fallthru
      _
    // Predicated region
    $region46: #{tpu_custom_call.1} parent=1 // pred_check
      _
    $region47: #{tpu_custom_call.1} parent=1 // pred_check_branch
      %459 = sbr.rel (0) target = $region49
    $region48: #{tpu_custom_call.1} parent=1 // pred_region
      %460 = dma.done [#allocation4], 512
    $region49: #{tpu_custom_call.1} parent=1 // pred_fallthru
      _
    %461 = vsyncpa [#allocation3], 1
    %462 = vsyncpa [#allocation6], 1
    %463 = vsyncpa [#allocation9], 1
    %464 = vsyncpa [#allocation4], 1

</llo_original>
